<compile_context>
chip_gen: v6e
topology: v6e:2x2x1
jax: 0.10.0
libtpu: 0.0.40
codegen_flags: <defaults>
</compile_context>

<pallas_src>
import jax
import jax.numpy as jnp
from jax.experimental import pallas as pl
from jax.experimental.pallas import tpu as pltpu


def _masked_mean_kernel(x_ref, m_ref, o_ref, den_ref):
    # x_ref:   (TB, TS, TF) input dtype
    # m_ref:   (TB, TS)     float32, lane-dense
    # o_ref:   (TB, TF)     float32; resident across the S grid axis => accumulator
    # den_ref: (TB, 1)      float32 VMEM scratch (mask-count denominator)
    s_step = pl.program_id(2)

    @pl.when(s_step == 0)
    def _init():
        o_ref[...] = jnp.zeros_like(o_ref)
        den_ref[...] = jnp.zeros_like(den_ref)

    m = m_ref[...]                                  # (TB, TS) f32
    x = x_ref[...]                                  # (TB, TS, TF) native dtype
    mb = m[:, :, None].astype(x.dtype)              # tiny XLU relayout, essentially free
    o_ref[...] += jnp.sum(x * mb, axis=1, dtype=jnp.float32)
    den_ref[...] += jnp.sum(m, axis=1, keepdims=True)

    @pl.when(s_step == pl.num_programs(2) - 1)
    def _finalize():
        o_ref[...] = o_ref[...] / jnp.maximum(den_ref[...], 1e-9)


def _x_block_budget_bytes() -> int:
    # Safe everywhere (v5e scoped default 16 MiB; v7x physical 64 MiB).
    budget = 4 << 20
    try:
        info = pltpu.get_tpu_info()
        if getattr(info, "vmem_capacity_bytes", 0) >= (96 << 20):
            budget = 8 << 20                        # v5e / v6e: 128 MiB physical VMEM
    except Exception:
        pass
    return budget


def _aligned_divisors(dim: int, align: int):
    """Full dim first (always a legal block dim), then align-multiples that divide dim."""
    cands = [dim]
    t = (dim // align) * align
    while t >= align:
        if t != dim and dim % t == 0:
            cands.append(t)
        t -= align
    return cands


def _plan_tiles(B, S, F, itemsize, budget):
    tb_min = 8 if B % 8 == 0 else B

    def x_bytes(tb, ts, tf):
        return tb * ts * tf * itemsize

    tf_cands = _aligned_divisors(F, 128)
    ts_cands = _aligned_divisors(S, 128)

    # Prefer TF = F (contiguous HBM runs); shrink TS before TF so DMA runs stay
    # as long as possible. First (tf, ts) pair that fits the budget wins.
    TS, TF = ts_cands[-1], tf_cands[-1]             # smallest legal fallback
    found = False
    for tf in tf_cands:
        for ts in ts_cands:
            if x_bytes(tb_min, ts, tf) <= budget:
                TS, TF = ts, tf
                found = True
                break
        if found:
            break

    # Grow TB (multiples of 8 dividing B) while the block stays within budget.
    TB = tb_min
    if B % 8 == 0:
        while TB * 2 <= B and B % (TB * 2) == 0 and x_bytes(TB * 2, TS, TF) <= budget:
            TB *= 2

    # v7x has two TensorCores: make sure at least one *parallel* grid axis has
    # more than one step so dimension_semantics can shard it (harmless elsewhere).
    if (B // TB) * (F // TF) == 1:
        if B % 16 == 0:
            TB = B // 2                             # still a multiple of 8
        elif F % 256 == 0:
            TF = F // 2                             # still a multiple of 128

    return TB, TS, TF


def masked_mean_pooling(inputs: jax.Array, mask: jax.Array, *,
                        block_budget_bytes: int | None = None) -> jax.Array:
    """Pallas equivalent of PtnMaskedMeanPoolingDef.forward.

    inputs: (B, S, F), mask: (B, S). Returns (B, F) float32.
    """
    if mask.ndim != 2:
        raise ValueError("Mask is not rank 2")
    if inputs.ndim != 3:
        raise ValueError("Inputs is not rank 3")

    x = inputs
    if not jnp.issubdtype(x.dtype, jnp.floating):
        x = x.astype(jnp.float32)
    maskf = mask.astype(jnp.float32)                # matches torch `mask.float()`

    B, S, F = x.shape
    orig_B = B
    # Pad batch to a multiple of 8 so the output block's sublane dim is always
    # legal, even for large non-aligned batches (padded rows have mask == 0).
    if B % 8 != 0 and B > 8:
        pad = (-B) % 8
        x = jnp.pad(x, ((0, pad), (0, 0), (0, 0)))
        maskf = jnp.pad(maskf, ((0, pad), (0, 0)))
        B += pad

    itemsize = jnp.dtype(x.dtype).itemsize
    budget = block_budget_bytes if block_budget_bytes is not None else _x_block_budget_bytes()
    TB, TS, TF = _plan_tiles(B, S, F, itemsize, budget)
    grid = (B // TB, F // TF, S // TS)

    # Explicit scoped-VMEM limit: double-buffered x + mask blocks, output block
    # (x2), small denominator scratch, plus margin. Capped so it stays safe on
    # every generation; only exceeded if the fallback tiles are oversized.
    x_blk = TB * TS * TF * itemsize
    m_blk = TB * TS * 4
    o_blk = TB * TF * 4
    vmem_est = 2 * (x_blk + m_blk) + 2 * o_blk + TB * 128 * 4
    vmem_limit = int(min(max(vmem_est * 7 // 4, 16 << 20), 32 << 20))
    if vmem_est * 9 // 8 > vmem_limit:
        vmem_limit = int(vmem_est * 9 // 8)

    out = pl.pallas_call(
        _masked_mean_kernel,
        out_shape=jax.ShapeDtypeStruct((B, F), jnp.float32),
        grid=grid,
        in_specs=[
            pl.BlockSpec((TB, TS, TF), lambda i, j, k: (i, k, j)),
            pl.BlockSpec((TB, TS), lambda i, j, k: (i, k)),
        ],
        out_specs=pl.BlockSpec((TB, TF), lambda i, j, k: (i, j)),
        scratch_shapes=[pltpu.VMEM((TB, 1), jnp.float32)],
        compiler_params=pltpu.CompilerParams(
            dimension_semantics=("parallel", "parallel", "arbitrary"),
            vmem_limit_bytes=vmem_limit),
        cost_estimate=pl.CostEstimate(
            flops=2 * B * S * F + B * F,
            transcendentals=0,
            bytes_accessed=B * S * F * itemsize + B * S * 4 + B * F * 4),
    )(x, maskf)

    if B != orig_B:
        out = out[:orig_B]
    return out


def _reference(inputs, mask):
    maskf = mask.astype(jnp.float32)
    num = jnp.sum(inputs.astype(jnp.float32) * maskf[:, :, None], axis=1)
    den = jnp.maximum(jnp.sum(maskf, axis=1, keepdims=True), 1e-9)
    return num / den


if __name__ == "__main__":
    key = jax.random.PRNGKey(0)
    k1, k2, k3, k4, k5, k6 = jax.random.split(key, 6)

    # --- Case 1: tiny shape consistent with the module's docstring ---
    B, S, F = 2, 8, 32
    x = jax.random.normal(k1, (B, S, F), dtype=jnp.float32)
    mask = (jax.random.uniform(k2, (B, S)) > 0.3).astype(jnp.float32)
    out = masked_mean_pooling(x, mask)
    jax.block_until_ready(out)
    ref = _reference(x, mask)
    assert out.shape == (B, F)
    assert jnp.allclose(out, ref, atol=1e-5, rtol=1e-5)

    # --- Case 2: multi-block parallel grid + an all-padding row (clamp path) ---
    B2, S2, F2 = 16, 128, 512
    x2 = jax.random.normal(k3, (B2, S2, F2), dtype=jnp.float32)
    mask2 = (jax.random.uniform(k4, (B2, S2)) > 0.5).astype(jnp.float32)
    mask2 = mask2.at[0].set(0.0)                    # all-padding row -> clamp(1e-9)
    out2 = masked_mean_pooling(x2, mask2)
    jax.block_until_ready(out2)
    ref2 = _reference(x2, mask2)
    assert out2.shape == (B2, F2)
    assert jnp.allclose(out2, ref2, atol=1e-5, rtol=1e-5)

    # --- Case 3: tiny forced block budget -> S-reduction accumulator + F tiling ---
    B3, S3, F3 = 8, 512, 256
    x3 = jax.random.normal(k5, (B3, S3, F3), dtype=jnp.float32)
    mask3 = (jax.random.uniform(k6, (B3, S3)) > 0.4).astype(jnp.float32)
    out3 = masked_mean_pooling(x3, mask3, block_budget_bytes=1 << 20)
    jax.block_until_ready(out3)
    ref3 = _reference(x3, mask3)
    assert jnp.allclose(out3, ref3, atol=1e-4, rtol=1e-4)

    # --- Case 4: bf16 inputs (native-dtype blocks, f32 accumulation) ---
    x4 = x.astype(jnp.bfloat16)
    out4 = masked_mean_pooling(x4, mask)
    jax.block_until_ready(out4)
    ref4 = _reference(x4.astype(jnp.float32), mask)
    assert jnp.allclose(out4, ref4, atol=1e-4, rtol=1e-4)

    print("KERNEL_OK")
</pallas_src>

<mosaic_0001>
module attributes {stable_mosaic.version = 11 : i64} {
  func.func @_masked_mean_kernel(%arg0: i32, %arg1: i32, %arg2: i32, %arg3: memref<2x8x32xf32, #tpu.memory_space<vmem>>, %arg4: memref<2x8xf32, #tpu.memory_space<vmem>>, %arg5: memref<2x32xf32, #tpu.memory_space<vmem>>, %arg6: memref<2x1xf32, #tpu.memory_space<vmem>>) attributes {dimension_semantics = [#tpu.dimension_semantics<parallel>, #tpu.dimension_semantics<parallel>, #tpu.dimension_semantics<arbitrary>], iteration_bounds = array<i64: 1, 1, 1>, scalar_prefetch = 0 : i64, scratch_operands = 1 : i64, tpu.core_type = #tpu.core_type<tc>, window_params = [{transform_indices = @transform_0, window_bounds = array<i64: 2, 8, 32>}, {transform_indices = @transform_1, window_bounds = array<i64: 2, 8>}, {transform_indices = @transform_2, window_bounds = array<i64: 2, 32>}]} {
    %c0_i32 = arith.constant 0 : i32
    %0 = arith.cmpi eq, %arg2, %c0_i32 : i32
    %1 = arith.extui %0 : i1 to i32
    %c0_i32_0 = arith.constant 0 : i32
    %2 = arith.cmpi ne, %1, %c0_i32_0 : i32
    scf.if %2 {
      %cst_16 = arith.constant 0.000000e+00 : f32
      %20 = vector.broadcast %cst_16 : f32 to vector<2x32xf32>
      %c0_17 = arith.constant 0 : index
      %c0_18 = arith.constant 0 : index
      %21 = vector.load %arg5[%c0_17, %c0_18] : memref<2x32xf32, #tpu.memory_space<vmem>>, vector<2x32xf32>
      tpu.vector_store %arg5[%c0_17, %c0_18], %20 {strides = array<i32>} : memref<2x32xf32, #tpu.memory_space<vmem>>, vector<2x32xf32>,
      %cst_19 = arith.constant 0.000000e+00 : f32
      %22 = vector.broadcast %cst_19 : f32 to vector<2x1xf32>
      %c0_20 = arith.constant 0 : index
      %c0_21 = arith.constant 0 : index
      %23 = vector.load %arg6[%c0_20, %c0_21] : memref<2x1xf32, #tpu.memory_space<vmem>>, vector<2x1xf32>
      tpu.vector_store %arg6[%c0_20, %c0_21], %22 {strides = array<i32>} : memref<2x1xf32, #tpu.memory_space<vmem>>, vector<2x1xf32>,
    } else {
    }
    %c0 = arith.constant 0 : index
    %c0_1 = arith.constant 0 : index
    %3 = vector.load %arg4[%c0, %c0_1] : memref<2x8xf32, #tpu.memory_space<vmem>>, vector<2x8xf32>
    %c0_2 = arith.constant 0 : index
    %c0_3 = arith.constant 0 : index
    %c0_4 = arith.constant 0 : index
    %4 = vector.load %arg3[%c0_2, %c0_3, %c0_4] : memref<2x8x32xf32, #tpu.memory_space<vmem>>, vector<2x8x32xf32>
    %5 = vector.shape_cast %3 : vector<2x8xf32> to vector<2x8x1xf32>
    %c0_5 = arith.constant 0 : index
    %c0_6 = arith.constant 0 : index
    %6 = vector.load %arg5[%c0_5, %c0_6] : memref<2x32xf32, #tpu.memory_space<vmem>>, vector<2x32xf32>
    %7 = vector.broadcast %5 : vector<2x8x1xf32> to vector<2x8x32xf32>
    %8 = arith.mulf %4, %7 : vector<2x8x32xf32>
    %cst = arith.constant dense<0.000000e+00> : vector<2x32xf32>
    %9 = vector.multi_reduction <add>, %8, %cst [1] : vector<2x8x32xf32> to vector<2x32xf32>
    %10 = arith.addf %6, %9 : vector<2x32xf32>
    %c0_7 = arith.constant 0 : index
    %c0_8 = arith.constant 0 : index
    %11 = vector.load %arg5[%c0_7, %c0_8] : memref<2x32xf32, #tpu.memory_space<vmem>>, vector<2x32xf32>
    tpu.vector_store %arg5[%c0_7, %c0_8], %10 {strides = array<i32>} : memref<2x32xf32, #tpu.memory_space<vmem>>, vector<2x32xf32>,
    %c0_9 = arith.constant 0 : index
    %c0_10 = arith.constant 0 : index
    %12 = vector.load %arg6[%c0_9, %c0_10] : memref<2x1xf32, #tpu.memory_space<vmem>>, vector<2x1xf32>
    %cst_11 = arith.constant dense<0.000000e+00> : vector<2xf32>
    %13 = vector.multi_reduction <add>, %3, %cst_11 [1] : vector<2x8xf32> to vector<2xf32>
    %14 = vector.shape_cast %13 : vector<2xf32> to vector<2x1xf32>
    %15 = arith.addf %12, %14 : vector<2x1xf32>
    %c0_12 = arith.constant 0 : index
    %c0_13 = arith.constant 0 : index
    %16 = vector.load %arg6[%c0_12, %c0_13] : memref<2x1xf32, #tpu.memory_space<vmem>>, vector<2x1xf32>
    tpu.vector_store %arg6[%c0_12, %c0_13], %15 {strides = array<i32>} : memref<2x1xf32, #tpu.memory_space<vmem>>, vector<2x1xf32>,
    %c0_i32_14 = arith.constant 0 : i32
    %17 = arith.cmpi eq, %arg2, %c0_i32_14 : i32
    %18 = arith.extui %17 : i1 to i32
    %c0_i32_15 = arith.constant 0 : i32
    %19 = arith.cmpi ne, %18, %c0_i32_15 : i32
    scf.if %19 {
      %c0_16 = arith.constant 0 : index
      %c0_17 = arith.constant 0 : index
      %20 = vector.load %arg5[%c0_16, %c0_17] : memref<2x32xf32, #tpu.memory_space<vmem>>, vector<2x32xf32>
      %c0_18 = arith.constant 0 : index
      %c0_19 = arith.constant 0 : index
      %21 = vector.load %arg6[%c0_18, %c0_19] : memref<2x1xf32, #tpu.memory_space<vmem>>, vector<2x1xf32>
      %cst_20 = arith.constant 9.99999971E-10 : f32
      %22 = vector.broadcast %cst_20 : f32 to vector<2x1xf32>
      %23 = arith.maximumf %21, %22 : vector<2x1xf32>
      %24 = vector.broadcast %23 : vector<2x1xf32> to vector<2x32xf32>
      %25 = arith.divf %20, %24 : vector<2x32xf32>
      %c0_21 = arith.constant 0 : index
      %c0_22 = arith.constant 0 : index
      %26 = vector.load %arg5[%c0_21, %c0_22] : memref<2x32xf32, #tpu.memory_space<vmem>>, vector<2x32xf32>
      tpu.vector_store %arg5[%c0_21, %c0_22], %25 {strides = array<i32>} : memref<2x32xf32, #tpu.memory_space<vmem>>, vector<2x32xf32>,
    } else {
    }
    return
  }
  func.func @transform_0(%arg0: i32, %arg1: i32, %arg2: i32) -> (i32, i32, i32) {
    %c0_i32 = arith.constant 0 : i32
    return %arg0, %arg2, %arg1 : i32, i32, i32
  }
  func.func @transform_1(%arg0: i32, %arg1: i32, %arg2: i32) -> (i32, i32) {
    %c0_i32 = arith.constant 0 : i32
    return %arg0, %arg2 : i32, i32
  }
  func.func @transform_2(%arg0: i32, %arg1: i32, %arg2: i32) -> (i32, i32) {
    %c0_i32 = arith.constant 0 : i32
    return %arg0, %arg1 : i32, i32
  }
}

</mosaic_0001>

<llo_original>
// kernel: tpu_custom_call.1
$region0: #{tpu_custom_call.1}
  #allocation0 [shape = 'u32[]', space=smem, size = 0x4, offset = 0x4, fixed_abs, tag = 'smem constant byte address 0x4 - core index']
  #allocation1 [shape = 'u32[144,128]{1,0:T(1,128)}', space=vmem, size = 0x12000, scoped, tag = 'internal scratch']
  #allocation2 [shape = 'f32[2,1]{1,0:T(2,128)}', space=vmem, size = 0x400, scoped, tag = 'scratch operand']
  %s0 = inlined_call_operand.hbm [shape: f32[2,8,32], index: 0, kind: input, shape index: {}]
  %s1 = inlined_call_operand.hbm [shape: f32[2,8], index: 1, kind: input, shape index: {}]
  %s2 = inlined_call_operand.hbm [shape: f32[2,32], index: 2, kind: output, shape index: {}]
  %s3 = sld [smem:[#allocation0]]
  $region34: #{tpu_custom_call.1} parent=0
    _
  %s5 = ssub.s32 1, %s3
  %s6 = scalar_select 0, %s5, %s3
  $region1: #{tpu_custom_call.1} parent=0
    #allocation3 [shape = 'u8[8192]{0}', space=vmem, size = 0x2000, scoped, tag = 'input window, operand 0, single buffered']
    #allocation4 [shape = 's32[1]{0}', space=sflag, size = 0x4, scoped, tag = 'scoped memory for tpu_custom_call.1']
    #allocation5 [shape = 's32[1]{0}', space=sflag, size = 0x4, scoped, tag = 'scoped memory for tpu_custom_call.1']
    #allocation6 [shape = 'u8[1024]{0}', space=vmem, size = 0x400, scoped, tag = 'input window, operand 1, single buffered']
    #allocation7 [shape = 's32[1]{0}', space=sflag, size = 0x4, scoped, tag = 'scoped memory for tpu_custom_call.1']
    #allocation8 [shape = 'u8[1024]{0}', space=vmem, size = 0x400, scoped, tag = 'output window, operand 0, single buffered']
    %7 = vsyncpa [#allocation4], 0
    %8 = vsyncpa [#allocation7], 0
    %9 = vsyncpa [#allocation5], 0
    // Predicated region
    $region2: #{tpu_custom_call.1} parent=1 // pred_check
      _
    $region3: #{tpu_custom_call.1} parent=1 // pred_check_branch
      %11 = sbr.rel (0) target = $region5
    $region4: #{tpu_custom_call.1} parent=1 // pred_region
      %s13 = ssub.s32 256, 256
      %14 = vsyncadd [#allocation4], %s13
      %s15 = sshll.u32 [#allocation3], 4
      %s16 = int_to_ptr.vmem [resolvable:$true] %s15
      %21 = dma.hbm_to_vmem [thread:$0]  %s0, 256, %s16, [#allocation4], 128, 128, 8
    $region5: #{tpu_custom_call.1} parent=1 // pred_fallthru
      _
    // Predicated region
    $region6: #{tpu_custom_call.1} parent=1 // pred_check
      _
    $region7: #{tpu_custom_call.1} parent=1 // pred_check_branch
      %23 = sbr.rel (0) target = $region9
    $region8: #{tpu_custom_call.1} parent=1 // pred_region
      %s25 = ssub.s32 32, 32
      %26 = vsyncadd [#allocation7], %s25
      %s28 = sshll.u32 [#allocation6], 4
      %s29 = int_to_ptr.vmem [resolvable:$true] %s28
      %31 = dma.hbm_to_vmem [thread:$0]  %s1, 32, %s29, [#allocation7]
    $region9: #{tpu_custom_call.1} parent=1 // pred_fallthru
      _
    // Predicated region
    $region10: #{tpu_custom_call.1} parent=1 // pred_check
      _
    $region11: #{tpu_custom_call.1} parent=1 // pred_check_branch
      %33 = sbr.rel (0) target = $region13
    $region12: #{tpu_custom_call.1} parent=1 // pred_region
      %34 = dma.done [#allocation4], 256
    $region13: #{tpu_custom_call.1} parent=1 // pred_fallthru
      _
    // Predicated region
    $region14: #{tpu_custom_call.1} parent=1 // pred_check
      _
    $region15: #{tpu_custom_call.1} parent=1 // pred_check_branch
      %36 = sbr.rel (0) target = $region17
    $region16: #{tpu_custom_call.1} parent=1 // pred_region
      %37 = dma.done [#allocation7], 32
    $region17: #{tpu_custom_call.1} parent=1 // pred_fallthru
      _
    %p38 = scmp.eq.s32.totalorder 0, 0
    // Predicated region
    $region18: #{tpu_custom_call.1} parent=1 // pred_check
      %p39 = pneg %p38
    $region19: #{tpu_custom_call.1} parent=1 // pred_check_branch
      %41 = sbr.rel (%p39) target = $region21
    $region20: #{tpu_custom_call.1} parent=1 // pred_region
      %vm42 = vcmask 254976
      %43 = vst.msk [vmem:[#allocation8] sm:$0x3] %vm42, 0.0
      %vm44 = vcmask 1024
      %45 = vst.msk [vmem:[#allocation2] sm:$0x3] %vm44, 0.0
    $region21: #{tpu_custom_call.1} parent=1 // pred_fallthru
      _
    %v46 = vld [vmem:[#allocation6] sm:$0x3]
    %v47 = vld [vmem:[#allocation3] sm:$0xff]
    %v48 = vld [vmem:[#allocation3 + $0x8] sm:$0xff]
    %v49 = vlaneseq
    %v50 = vshrl.u32 %v49, 7
    %v51 = vsub.s32 0, %v50
    %v52 = vrot.slane %v46, %v51
    %54 = vbcast.lane.b32.xlu0 %v52, 256
    %v55 = vpop.permute.xlu0 %54
    %v56 = vlaneseq
    %v57 = vshrl.u32 %v56, 7
    %v58 = vsub.s32 1, %v57
    %v59 = vrot.slane %v46, %v58
    %61 = vbcast.lane.b32.xlu0 %v59, 256
    %v62 = vpop.permute.xlu0 %61
    %v63 = vld [vmem:[#allocation8] sm:$0x3]
    %v64 = vmul.f32 %v47, %v55
    %v65 = vmul.f32 %v48, %v62
    %vm66 = vcmask 261120
    %v67 = vsel %vm66, %v64, 0.0
    %v68 = vrot.slane %v67, 4
    %v69 = vadd.f32 %v67, %v68
    %v70 = vrot.slane %v69, 2
    %v71 = vadd.f32 %v69, %v70
    %v72 = vrot.slane %v71, 1
    %v73 = vadd.f32 %v71, %v72
    %v74 = vsel %vm66, %v65, 0.0
    %v75 = vrot.slane %v74, 4
    %v76 = vadd.f32 %v74, %v75
    %v77 = vrot.slane %v76, 2
    %v78 = vadd.f32 %v76, %v77
    %v79 = vrot.slane %v78, 1
    %v80 = vadd.f32 %v78, %v79
    %vm83 = vcmask 1041409
    %v84 = vsel %vm83, %v80, %v73
    %v86 = vadd.f32 %v63, %v84
    %vm87 = vcmask 254976
    %88 = vst.msk [vmem:[#allocation8] sm:$0x3] %vm87, %v86
    %v89 = vld [vmem:[#allocation2] sm:$0x3]
    %vm90 = vcmask 58368
    %v91 = vsel %vm90, %v46, 0.0
    %92 = vadd.xlane.f32.xlu0 %v91
    %v93 = vpop.xlane.xlu0 %92
    %v94 = vadd.f32 %v89, %v93
    %vm95 = vcmask 1024
    %96 = vst.msk [vmem:[#allocation2] sm:$0x3] %vm95, %v94
    // Predicated region
    $region22: #{tpu_custom_call.1} parent=1 // pred_check
      %p97 = pneg %p38
    $region23: #{tpu_custom_call.1} parent=1 // pred_check_branch
      %99 = sbr.rel (%p97) target = $region25
    $region24: #{tpu_custom_call.1} parent=1 // pred_region
      %v100 = vld [vmem:[#allocation8] sm:$0x3]
      %v101 = vld [vmem:[#allocation2] sm:$0x3]
      %v102 = vmax.f32 %v101, 1e-09
      %104 = vset.pattern.permute.xlu0 0
      %105 = vperm.xlu0 %104, %v102
      %v106 = vpop.permute.xlu0 %105
      %v108 = vrcp.pop %v106
      %v109 = vmul.f32 %v100, %v108
      %110 = vst.msk [vmem:[#allocation8] sm:$0x3] %vm87, %v109
    $region25: #{tpu_custom_call.1} parent=1 // pred_fallthru
      _
    // Predicated region
    $region26: #{tpu_custom_call.1} parent=1 // pred_check
      _
    $region27: #{tpu_custom_call.1} parent=1 // pred_check_branch
      %112 = sbr.rel (0) target = $region29
    $region28: #{tpu_custom_call.1} parent=1 // pred_region
      %s114 = ssub.s32 32, 32
      %115 = vsyncadd [#allocation5], %s114
      %s117 = sshll.u32 [#allocation8], 4
      %s118 = int_to_ptr.vmem [resolvable:$true] %s117
      %120 = dma.vmem_to_hbm [thread:$0]  %s118, 32, %s2, [#allocation5]
    $region29: #{tpu_custom_call.1} parent=1 // pred_fallthru
      _
    // Predicated region
    $region30: #{tpu_custom_call.1} parent=1 // pred_check
      _
    $region31: #{tpu_custom_call.1} parent=1 // pred_check_branch
      %122 = sbr.rel (0) target = $region33
    $region32: #{tpu_custom_call.1} parent=1 // pred_region
      %123 = dma.done [#allocation5], 32
    $region33: #{tpu_custom_call.1} parent=1 // pred_fallthru
      _
    %124 = vsyncpa [#allocation4], 1
    %125 = vsyncpa [#allocation7], 1
    %126 = vsyncpa [#allocation5], 1

</llo_original>
